<compile_context>
chip_gen: v6e
topology: v6e:2x2x1
jax: 0.10.0
libtpu: 0.0.40
codegen_flags: <defaults>
</compile_context>

<pallas_src>
import jax
import jax.numpy as jnp
from jax.experimental import pallas as pl
from jax.experimental.pallas import tpu as pltpu

_NEG_FILL = -1e9  # sigmoid(_NEG_FILL) == 0 exactly -> padded columns are inert


def _round_up(x: int, m: int) -> int:
    return ((x + m - 1) // m) * m


def _make_dice_kernel(epsilon: float):
    def dice_kernel(logits_ref, targets_ref, out_ref,
                    inter_acc, p_acc, t_acc):
        k = pl.program_id(1)

        @pl.when(k == 0)
        def _():
            inter_acc[...] = jnp.zeros_like(inter_acc)
            p_acc[...] = jnp.zeros_like(p_acc)
            t_acc[...] = jnp.zeros_like(t_acc)

        # Inputs may be narrow (bf16 / int8 masks); compute in f32 (safe on v5e).
        logits = logits_ref[...].astype(jnp.float32)
        targets = targets_ref[...].astype(jnp.float32)
        probs = jax.nn.sigmoid(logits)                      # VPU + EUP

        inter_acc[...] += jnp.sum(probs * targets, axis=-1, keepdims=True)
        p_acc[...] += jnp.sum(probs, axis=-1, keepdims=True)
        t_acc[...] += jnp.sum(targets, axis=-1, keepdims=True)

        @pl.when(k == pl.num_programs(1) - 1)
        def _():
            num = 2.0 * inter_acc[...] + epsilon            # (t_bc, 1)
            den = p_acc[...] + t_acc[...] + epsilon         # (t_bc, 1)
            out_ref[...] = 1.0 - num / den                  # per-(batch, class)

    return dice_kernel


def dice_loss_pallas(logits, targets, epsilon=1e-6, *,
                     block_bytes=4 * 1024 * 1024, max_row_tile=256):
    """Dice loss matching the PyTorch DiceLoss.forward semantics.

    logits, targets: (B, C, H, W), any float/int dtype. Returns a f32 scalar.
    """
    assert logits.shape == targets.shape and logits.ndim == 4
    B, C, H, W = logits.shape
    BC, HW = B * C, H * W

    l2 = logits.reshape(BC, HW)
    t2 = targets.reshape(BC, HW)

    # Sublane granularity by packing: f32 -> 8, bf16 -> 16, int8/bool -> 32.
    sub = max(8, 32 // l2.dtype.itemsize, 32 // t2.dtype.itemsize)

    # --- row (batch*class) tiling: bounds VMEM independent of B*C ----------
    grid_bc = pl.cdiv(BC, max_row_tile)
    t_bc = _round_up(pl.cdiv(BC, grid_bc), sub)
    bc_pad = grid_bc * t_bc

    # --- spatial tiling: size blocks from a VMEM byte budget ---------------
    # block_bytes covers one pipeline buffer of BOTH inputs; with the default
    # 2-deep pipelining total input VMEM ~= 2 * block_bytes, well under the
    # explicit 32 MiB scoped-VMEM limit below (safe on v5e/v6e/v7x).
    bytes_per_elem = l2.dtype.itemsize + t2.dtype.itemsize
    max_block_elems = max(block_bytes // bytes_per_elem, t_bc * 128)
    t_hw_cap = max(128, (max_block_elems // t_bc) // 128 * 128)

    hw_128 = _round_up(HW, 128)
    if hw_128 <= t_hw_cap:
        grid_k, t_hw = 1, hw_128
    else:
        grid_k = pl.cdiv(hw_128, t_hw_cap)
        t_hw = _round_up(pl.cdiv(hw_128, grid_k), 128)   # even tiles, pad < 128/tile
    hw_pad = grid_k * t_hw

    # --- pad instead of shrinking tiles / whole-HW single-block fallback ---
    if bc_pad != BC or hw_pad != HW:
        l2 = jnp.pad(l2, ((0, bc_pad - BC), (0, hw_pad - HW)),
                     constant_values=_NEG_FILL)
        t2 = jnp.pad(t2, ((0, bc_pad - BC), (0, hw_pad - HW)),
                     constant_values=0)

    kernel = _make_dice_kernel(float(epsilon))

    per_row = pl.pallas_call(
        kernel,
        out_shape=jax.ShapeDtypeStruct((bc_pad, 1), jnp.float32),
        grid_spec=pltpu.PrefetchScalarGridSpec(
            num_scalar_prefetch=0,
            grid=(grid_bc, grid_k),
            in_specs=[
                pl.BlockSpec((t_bc, t_hw), lambda i, k: (i, k)),
                pl.BlockSpec((t_bc, t_hw), lambda i, k: (i, k)),
            ],
            out_specs=pl.BlockSpec((t_bc, 1), lambda i, k: (i, 0)),
            scratch_shapes=[
                pltpu.VMEM((t_bc, 1), jnp.float32),
                pltpu.VMEM((t_bc, 1), jnp.float32),
                pltpu.VMEM((t_bc, 1), jnp.float32),
            ],
        ),
        compiler_params=pltpu.CompilerParams(
            # Row tiles are independent -> shard across TensorCores (v7x);
            # the spatial axis is the streamed reduction.
            dimension_semantics=("parallel", "arbitrary"),
            vmem_limit_bytes=32 * 1024 * 1024,
        ),
    )(l2, t2)

    # Mean over the true (unpadded) batch*class rows, done in the wrapper.
    return jnp.mean(per_row[:BC, 0])


def dice_loss_ref(logits, targets, epsilon=1e-6):
    probs = jax.nn.sigmoid(logits.astype(jnp.float32))
    t = targets.astype(jnp.float32)
    num = 2.0 * jnp.sum(probs * t, axis=(2, 3)) + epsilon
    den = jnp.sum(probs, axis=(2, 3)) + jnp.sum(t, axis=(2, 3)) + epsilon
    return jnp.mean(1.0 - num / den)


if __name__ == "__main__":
    key = jax.random.PRNGKey(0)
    k1, k2, k3, k4 = jax.random.split(key, 4)

    # Case 1: nominal small shape; targets passed as bf16 (binary masks are
    # exact in bf16) to cut their HBM traffic in half.
    B, C, H, W = 2, 4, 16, 16
    logits = jax.random.normal(k1, (B, C, H, W), dtype=jnp.float32)
    targets = (jax.random.uniform(k2, (B, C, H, W)) > 0.5).astype(jnp.bfloat16)

    loss = jax.block_until_ready(dice_loss_pallas(logits, targets))
    ref = dice_loss_ref(logits, targets)
    assert jnp.allclose(loss, ref, atol=1e-5, rtol=1e-5), (loss, ref)

    # Case 2: non-aligned shape + tiny block budget to exercise row/column
    # padding and the multi-step (grid_k > 1) reduction path.
    B2, C2, H2, W2 = 2, 3, 20, 20
    logits2 = jax.random.normal(k3, (B2, C2, H2, W2), dtype=jnp.float32)
    targets2 = (jax.random.uniform(k4, (B2, C2, H2, W2)) > 0.5).astype(jnp.float32)

    loss2 = jax.block_until_ready(
        dice_loss_pallas(logits2, targets2, block_bytes=16 * 1024))
    ref2 = dice_loss_ref(logits2, targets2)
    assert jnp.allclose(loss2, ref2, atol=1e-5, rtol=1e-5), (loss2, ref2)

    print("KERNEL_OK")
</pallas_src>

<mosaic_0001>
module attributes {stable_mosaic.version = 11 : i64} {
  func.func @dice_kernel(%arg0: i32, %arg1: i32, %arg2: memref<16x256xf32, #tpu.memory_space<vmem>>, %arg3: memref<16x256xbf16, #tpu.memory_space<vmem>>, %arg4: memref<16x1xf32, #tpu.memory_space<vmem>>, %arg5: memref<16x1xf32, #tpu.memory_space<vmem>>, %arg6: memref<16x1xf32, #tpu.memory_space<vmem>>, %arg7: memref<16x1xf32, #tpu.memory_space<vmem>>) attributes {dimension_semantics = [#tpu.dimension_semantics<parallel>, #tpu.dimension_semantics<arbitrary>], iteration_bounds = array<i64: 1, 1>, scalar_prefetch = 0 : i64, scratch_operands = 3 : i64, tpu.core_type = #tpu.core_type<tc>, window_params = [{transform_indices = @transform_0, window_bounds = array<i64: 16, 256>}, {transform_indices = @transform_1, window_bounds = array<i64: 16, 256>}, {transform_indices = @transform_2, window_bounds = array<i64: 16, 1>}]} {
    %c0_i32 = arith.constant 0 : i32
    %0 = arith.cmpi eq, %arg1, %c0_i32 : i32
    %1 = arith.extui %0 : i1 to i32
    %c0_i32_0 = arith.constant 0 : i32
    %2 = arith.cmpi ne, %1, %c0_i32_0 : i32
    scf.if %2 {
      %cst_21 = arith.constant 0.000000e+00 : f32
      %30 = vector.broadcast %cst_21 : f32 to vector<16x1xf32>
      %c0_22 = arith.constant 0 : index
      %c0_23 = arith.constant 0 : index
      %31 = vector.load %arg5[%c0_22, %c0_23] : memref<16x1xf32, #tpu.memory_space<vmem>>, vector<16x1xf32>
      tpu.vector_store %arg5[%c0_22, %c0_23], %30 {strides = array<i32>} : memref<16x1xf32, #tpu.memory_space<vmem>>, vector<16x1xf32>,
      %cst_24 = arith.constant 0.000000e+00 : f32
      %32 = vector.broadcast %cst_24 : f32 to vector<16x1xf32>
      %c0_25 = arith.constant 0 : index
      %c0_26 = arith.constant 0 : index
      %33 = vector.load %arg6[%c0_25, %c0_26] : memref<16x1xf32, #tpu.memory_space<vmem>>, vector<16x1xf32>
      tpu.vector_store %arg6[%c0_25, %c0_26], %32 {strides = array<i32>} : memref<16x1xf32, #tpu.memory_space<vmem>>, vector<16x1xf32>,
      %cst_27 = arith.constant 0.000000e+00 : f32
      %34 = vector.broadcast %cst_27 : f32 to vector<16x1xf32>
      %c0_28 = arith.constant 0 : index
      %c0_29 = arith.constant 0 : index
      %35 = vector.load %arg7[%c0_28, %c0_29] : memref<16x1xf32, #tpu.memory_space<vmem>>, vector<16x1xf32>
      tpu.vector_store %arg7[%c0_28, %c0_29], %34 {strides = array<i32>} : memref<16x1xf32, #tpu.memory_space<vmem>>, vector<16x1xf32>,
    } else {
    }
    %c0 = arith.constant 0 : index
    %c0_1 = arith.constant 0 : index
    %3 = vector.load %arg2[%c0, %c0_1] : memref<16x256xf32, #tpu.memory_space<vmem>>, vector<16x256xf32>
    %c0_2 = arith.constant 0 : index
    %c0_3 = arith.constant 0 : index
    %4 = vector.load %arg3[%c0_2, %c0_3] : memref<16x256xbf16, #tpu.memory_space<vmem>>, vector<16x256xbf16>
    %5 = arith.extf %4 : vector<16x256xbf16> to vector<16x256xf32>
    %6 = arith.negf %3 : vector<16x256xf32>
    %7 = math.exp %6 : vector<16x256xf32>
    %cst = arith.constant 1.000000e+00 : f32
    %8 = vector.broadcast %cst : f32 to vector<16x256xf32>
    %9 = arith.addf %8, %7 : vector<16x256xf32>
    %10 = arith.divf %8, %9 : vector<16x256xf32>
    %c0_4 = arith.constant 0 : index
    %c0_5 = arith.constant 0 : index
    %11 = vector.load %arg5[%c0_4, %c0_5] : memref<16x1xf32, #tpu.memory_space<vmem>>, vector<16x1xf32>
    %12 = arith.mulf %10, %5 : vector<16x256xf32>
    %cst_6 = arith.constant dense<0.000000e+00> : vector<16xf32>
    %13 = vector.multi_reduction <add>, %12, %cst_6 [1] : vector<16x256xf32> to vector<16xf32>
    %14 = vector.shape_cast %13 : vector<16xf32> to vector<16x1xf32>
    %15 = arith.addf %11, %14 : vector<16x1xf32>
    %c0_7 = arith.constant 0 : index
    %c0_8 = arith.constant 0 : index
    %16 = vector.load %arg5[%c0_7, %c0_8] : memref<16x1xf32, #tpu.memory_space<vmem>>, vector<16x1xf32>
    tpu.vector_store %arg5[%c0_7, %c0_8], %15 {strides = array<i32>} : memref<16x1xf32, #tpu.memory_space<vmem>>, vector<16x1xf32>,
    %c0_9 = arith.constant 0 : index
    %c0_10 = arith.constant 0 : index
    %17 = vector.load %arg6[%c0_9, %c0_10] : memref<16x1xf32, #tpu.memory_space<vmem>>, vector<16x1xf32>
    %cst_11 = arith.constant dense<0.000000e+00> : vector<16xf32>
    %18 = vector.multi_reduction <add>, %10, %cst_11 [1] : vector<16x256xf32> to vector<16xf32>
    %19 = vector.shape_cast %18 : vector<16xf32> to vector<16x1xf32>
    %20 = arith.addf %17, %19 : vector<16x1xf32>
    %c0_12 = arith.constant 0 : index
    %c0_13 = arith.constant 0 : index
    %21 = vector.load %arg6[%c0_12, %c0_13] : memref<16x1xf32, #tpu.memory_space<vmem>>, vector<16x1xf32>
    tpu.vector_store %arg6[%c0_12, %c0_13], %20 {strides = array<i32>} : memref<16x1xf32, #tpu.memory_space<vmem>>, vector<16x1xf32>,
    %c0_14 = arith.constant 0 : index
    %c0_15 = arith.constant 0 : index
    %22 = vector.load %arg7[%c0_14, %c0_15] : memref<16x1xf32, #tpu.memory_space<vmem>>, vector<16x1xf32>
    %cst_16 = arith.constant dense<0.000000e+00> : vector<16xf32>
    %23 = vector.multi_reduction <add>, %5, %cst_16 [1] : vector<16x256xf32> to vector<16xf32>
    %24 = vector.shape_cast %23 : vector<16xf32> to vector<16x1xf32>
    %25 = arith.addf %22, %24 : vector<16x1xf32>
    %c0_17 = arith.constant 0 : index
    %c0_18 = arith.constant 0 : index
    %26 = vector.load %arg7[%c0_17, %c0_18] : memref<16x1xf32, #tpu.memory_space<vmem>>, vector<16x1xf32>
    tpu.vector_store %arg7[%c0_17, %c0_18], %25 {strides = array<i32>} : memref<16x1xf32, #tpu.memory_space<vmem>>, vector<16x1xf32>,
    %c0_i32_19 = arith.constant 0 : i32
    %27 = arith.cmpi eq, %arg1, %c0_i32_19 : i32
    %28 = arith.extui %27 : i1 to i32
    %c0_i32_20 = arith.constant 0 : i32
    %29 = arith.cmpi ne, %28, %c0_i32_20 : i32
    scf.if %29 {
      %c0_21 = arith.constant 0 : index
      %c0_22 = arith.constant 0 : index
      %30 = vector.load %arg5[%c0_21, %c0_22] : memref<16x1xf32, #tpu.memory_space<vmem>>, vector<16x1xf32>
      %cst_23 = arith.constant 2.000000e+00 : f32
      %31 = vector.broadcast %cst_23 : f32 to vector<16x1xf32>
      %32 = arith.mulf %31, %30 : vector<16x1xf32>
      %cst_24 = arith.constant 9.99999997E-7 : f32
      %33 = vector.broadcast %cst_24 : f32 to vector<16x1xf32>
      %34 = arith.addf %32, %33 : vector<16x1xf32>
      %c0_25 = arith.constant 0 : index
      %c0_26 = arith.constant 0 : index
      %35 = vector.load %arg6[%c0_25, %c0_26] : memref<16x1xf32, #tpu.memory_space<vmem>>, vector<16x1xf32>
      %c0_27 = arith.constant 0 : index
      %c0_28 = arith.constant 0 : index
      %36 = vector.load %arg7[%c0_27, %c0_28] : memref<16x1xf32, #tpu.memory_space<vmem>>, vector<16x1xf32>
      %37 = arith.addf %35, %36 : vector<16x1xf32>
      %cst_29 = arith.constant 9.99999997E-7 : f32
      %38 = vector.broadcast %cst_29 : f32 to vector<16x1xf32>
      %39 = arith.addf %37, %38 : vector<16x1xf32>
      %40 = arith.divf %34, %39 : vector<16x1xf32>
      %cst_30 = arith.constant 1.000000e+00 : f32
      %41 = vector.broadcast %cst_30 : f32 to vector<16x1xf32>
      %42 = arith.subf %41, %40 : vector<16x1xf32>
      %c0_31 = arith.constant 0 : index
      %c0_32 = arith.constant 0 : index
      %43 = vector.load %arg4[%c0_31, %c0_32] : memref<16x1xf32, #tpu.memory_space<vmem>>, vector<16x1xf32>
      tpu.vector_store %arg4[%c0_31, %c0_32], %42 {strides = array<i32>} : memref<16x1xf32, #tpu.memory_space<vmem>>, vector<16x1xf32>,
    } else {
    }
    return
  }
  func.func @transform_0(%arg0: i32, %arg1: i32) -> (i32, i32) {
    %c0_i32 = arith.constant 0 : i32
    return %arg0, %arg1 : i32, i32
  }
  func.func @transform_1(%arg0: i32, %arg1: i32) -> (i32, i32) {
    %c0_i32 = arith.constant 0 : i32
    return %arg0, %arg1 : i32, i32
  }
  func.func @transform_2(%arg0: i32, %arg1: i32) -> (i32, i32) {
    %c0_i32 = arith.constant 0 : i32
    %c0_i32_0 = arith.constant 0 : i32
    return %arg0, %c0_i32 : i32, i32
  }
}

</mosaic_0001>

<llo_original>
// kernel: tpu_custom_call.1
$region0: #{tpu_custom_call.1}
  #allocation0 [shape = 'u32[]', space=smem, size = 0x4, offset = 0x4, fixed_abs, tag = 'smem constant byte address 0x4 - core index']
  #allocation1 [shape = 'u32[144,128]{1,0:T(1,128)}', space=vmem, size = 0x12000, scoped, tag = 'internal scratch']
  #allocation2 [shape = 'f32[16,1]{1,0:T(8,128)}', space=vmem, size = 0x2000, scoped, tag = 'scratch operand']
  #allocation3 [shape = 'f32[16,1]{1,0:T(8,128)}', space=vmem, size = 0x2000, scoped, tag = 'scratch operand']
  #allocation4 [shape = 'f32[16,1]{1,0:T(8,128)}', space=vmem, size = 0x2000, scoped, tag = 'scratch operand']
  %s0 = inlined_call_operand.hbm [shape: f32[16,256], index: 0, kind: input, shape index: {}]
  %s1 = inlined_call_operand.hbm [shape: bf16[16,256], index: 1, kind: input, shape index: {}]
  %s2 = inlined_call_operand.vmem [shape: f32[16,1], index: 2, kind: output, shape index: {}]
  %s3 = sld [smem:[#allocation0]]
  $region34: #{tpu_custom_call.1} parent=0
    _
  %s5 = ssub.s32 1, %s3
  %s6 = scalar_select 0, %s5, %s3
  $region1: #{tpu_custom_call.1} parent=0
    #allocation5 [shape = 'u8[16384]{0}', space=vmem, size = 0x4000, scoped, tag = 'input window, operand 0, single buffered']
    #allocation6 [shape = 's32[1]{0}', space=sflag, size = 0x4, scoped, tag = 'scoped memory for tpu_custom_call.1']
    #allocation7 [shape = 'u8[8192]{0}', space=vmem, size = 0x2000, scoped, tag = 'input window, operand 1, single buffered']
    #allocation8 [shape = 's32[1]{0}', space=sflag, size = 0x4, scoped, tag = 'scoped memory for tpu_custom_call.1']
    %7 = vsyncpa [#allocation6], 0
    %8 = vsyncpa [#allocation8], 0
    // Predicated region
    $region2: #{tpu_custom_call.1} parent=1 // pred_check
      _
    $region3: #{tpu_custom_call.1} parent=1 // pred_check_branch
      %10 = sbr.rel (0) target = $region5
    $region4: #{tpu_custom_call.1} parent=1 // pred_region
      %s12 = ssub.s32 512, 512
      %13 = vsyncadd [#allocation6], %s12
      %s14 = sshll.u32 [#allocation5], 4
      %s15 = int_to_ptr.vmem [resolvable:$true] %s14
      %20 = dma.hbm_to_vmem [thread:$0]  %s0, 512, %s15, [#allocation6], 256, 256, 16
    $region5: #{tpu_custom_call.1} parent=1 // pred_fallthru
      _
    // Predicated region
    $region6: #{tpu_custom_call.1} parent=1 // pred_check
      _
    $region7: #{tpu_custom_call.1} parent=1 // pred_check_branch
      %22 = sbr.rel (0) target = $region9
    $region8: #{tpu_custom_call.1} parent=1 // pred_region
      %s24 = ssub.s32 256, 256
      %25 = vsyncadd [#allocation8], %s24
      %s26 = sshll.u32 [#allocation7], 4
      %s27 = int_to_ptr.vmem [resolvable:$true] %s26
      %32 = dma.hbm_to_vmem [thread:$0]  %s1, 256, %s27, [#allocation8], 128, 128, 8
    $region9: #{tpu_custom_call.1} parent=1 // pred_fallthru
      _
    // Predicated region
    $region10: #{tpu_custom_call.1} parent=1 // pred_check
      _
    $region11: #{tpu_custom_call.1} parent=1 // pred_check_branch
      %34 = sbr.rel (0) target = $region13
    $region12: #{tpu_custom_call.1} parent=1 // pred_region
      %35 = dma.done [#allocation6], 512
    $region13: #{tpu_custom_call.1} parent=1 // pred_fallthru
      _
    // Predicated region
    $region14: #{tpu_custom_call.1} parent=1 // pred_check
      _
    $region15: #{tpu_custom_call.1} parent=1 // pred_check_branch
      %37 = sbr.rel (0) target = $region17
    $region16: #{tpu_custom_call.1} parent=1 // pred_region
      %38 = dma.done [#allocation8], 256
    $region17: #{tpu_custom_call.1} parent=1 // pred_fallthru
      _
    %p39 = scmp.eq.s32.totalorder 0, 0
    // Predicated region
    $region18: #{tpu_custom_call.1} parent=1 // pred_check
      %p40 = pneg %p39
    $region19: #{tpu_custom_call.1} parent=1 // pred_check_branch
      %42 = sbr.rel (%p40) target = $region21
    $region20: #{tpu_custom_call.1} parent=1 // pred_region
      %vm43 = vcmask 7168
      %44 = vst.msk [vmem:[#allocation2] sm:$0xff] %vm43, 0.0
      %45 = vst.msk [vmem:[#allocation2 + $0x8] sm:$0xff] %vm43, 0.0
      %46 = vst.msk [vmem:[#allocation3] sm:$0xff] %vm43, 0.0
      %47 = vst.msk [vmem:[#allocation3 + $0x8] sm:$0xff] %vm43, 0.0
      %48 = vst.msk [vmem:[#allocation4] sm:$0xff] %vm43, 0.0
      %49 = vst.msk [vmem:[#allocation4 + $0x8] sm:$0xff] %vm43, 0.0
    $region21: #{tpu_custom_call.1} parent=1 // pred_fallthru
      _
    %v50 = vld [vmem:[#allocation5] sm:$0xff]
    %v51 = vld [vmem:[#allocation5 + $0x8] sm:$0xff]
    %v52 = vld [vmem:[#allocation5 + $0x10] sm:$0xff]
    %v53 = vld [vmem:[#allocation5 + $0x18] sm:$0xff]
    %v54 = vld [vmem:[#allocation7] sm:$0xff]
    %v55 = vld [vmem:[#allocation7 + $0x8] sm:$0xff]
    %v56 = vunpack.c.l.bf16 %v54
    %v57 = vunpack.c.h.bf16 %v54
    %v58 = vunpack.c.l.bf16 %v55
    %v59 = vunpack.c.h.bf16 %v55
    %v60 = vxor.u32 %v50, 2147483648
    %v61 = vxor.u32 %v51, 2147483648
    %v62 = vxor.u32 %v52, 2147483648
    %v63 = vxor.u32 %v53, 2147483648
    %v64 = vmul.f32 %v60, 1.442695
    %v65 = vpow.pop %v64
    %v66 = vmul.f32 %v61, 1.442695
    %v67 = vpow.pop %v66
    %v68 = vmul.f32 %v62, 1.442695
    %v69 = vpow.pop %v68
    %v70 = vmul.f32 %v63, 1.442695
    %v71 = vpow.pop %v70
    %v72 = vadd.f32 %v65, 1.0
    %v73 = vadd.f32 %v67, 1.0
    %v74 = vadd.f32 %v69, 1.0
    %v75 = vadd.f32 %v71, 1.0
    %v76 = vrcp.pop %v72
    %v77 = vmul.f32 1.0, %v76
    %v78 = vrcp.pop %v73
    %v79 = vmul.f32 1.0, %v78
    %v80 = vrcp.pop %v74
    %v81 = vmul.f32 1.0, %v80
    %v82 = vrcp.pop %v75
    %v83 = vmul.f32 1.0, %v82
    %v84 = vld [vmem:[#allocation2] sm:$0xff]
    %v85 = vld [vmem:[#allocation2 + $0x8] sm:$0xff]
    %v86 = vmul.f32 %v77, %v56
    %v87 = vmul.f32 %v79, %v57
    %v88 = vmul.f32 %v81, %v58
    %v89 = vmul.f32 %v83, %v59
    %v90 = vadd.f32 %v86, %v87
    %91 = vadd.xlane.f32.xlu0 %v90
    %v92 = vpop.xlane.xlu0 %91
    %v93 = vadd.f32 %v88, %v89
    %94 = vadd.xlane.f32.xlu0 %v93
    %v95 = vpop.xlane.xlu0 %94
    %v96 = vadd.f32 %v84, %v92
    %v97 = vadd.f32 %v85, %v95
    %vm98 = vcmask 7168
    %99 = vst.msk [vmem:[#allocation2] sm:$0xff] %vm98, %v96
    %100 = vst.msk [vmem:[#allocation2 + $0x8] sm:$0xff] %vm98, %v97
    %v101 = vld [vmem:[#allocation3] sm:$0xff]
    %v102 = vld [vmem:[#allocation3 + $0x8] sm:$0xff]
    %v103 = vadd.f32 %v77, %v79
    %104 = vadd.xlane.f32.xlu0 %v103
    %v105 = vpop.xlane.xlu0 %104
    %v106 = vadd.f32 %v81, %v83
    %107 = vadd.xlane.f32.xlu0 %v106
    %v108 = vpop.xlane.xlu0 %107
    %v109 = vadd.f32 %v101, %v105
    %v110 = vadd.f32 %v102, %v108
    %111 = vst.msk [vmem:[#allocation3] sm:$0xff] %vm98, %v109
    %112 = vst.msk [vmem:[#allocation3 + $0x8] sm:$0xff] %vm98, %v110
    %v113 = vld [vmem:[#allocation4] sm:$0xff]
    %v114 = vld [vmem:[#allocation4 + $0x8] sm:$0xff]
    %v115 = vadd.f32 %v56, %v57
    %116 = vadd.xlane.f32.xlu0 %v115
    %v117 = vpop.xlane.xlu0 %116
    %v118 = vadd.f32 %v58, %v59
    %119 = vadd.xlane.f32.xlu0 %v118
    %v120 = vpop.xlane.xlu0 %119
    %v121 = vadd.f32 %v113, %v117
    %v122 = vadd.f32 %v114, %v120
    %123 = vst.msk [vmem:[#allocation4] sm:$0xff] %vm98, %v121
    %124 = vst.msk [vmem:[#allocation4 + $0x8] sm:$0xff] %vm98, %v122
    // Predicated region
    $region22: #{tpu_custom_call.1} parent=1 // pred_check
      %p125 = pneg %p39
    $region23: #{tpu_custom_call.1} parent=1 // pred_check_branch
      %127 = sbr.rel (%p125) target = $region25
    $region24: #{tpu_custom_call.1} parent=1 // pred_region
      %v128 = vld [vmem:[#allocation2] sm:$0xff]
      %v129 = vld [vmem:[#allocation2 + $0x8] sm:$0xff]
      %v130 = vmul.f32 %v128, 2.0
      %v131 = vmul.f32 %v129, 2.0
      %v132 = vadd.f32 %v130, 1e-06
      %v133 = vadd.f32 %v131, 1e-06
      %v134 = vld [vmem:[#allocation3] sm:$0xff]
      %v135 = vld [vmem:[#allocation3 + $0x8] sm:$0xff]
      %v136 = vld [vmem:[#allocation4] sm:$0xff]
      %v137 = vld [vmem:[#allocation4 + $0x8] sm:$0xff]
      %v138 = vadd.f32 %v134, %v136
      %v139 = vadd.f32 %v135, %v137
      %v140 = vadd.f32 %v138, 1e-06
      %v141 = vadd.f32 %v139, 1e-06
      %v142 = vrcp.pop %v140
      %v143 = vmul.f32 %v132, %v142
      %v144 = vrcp.pop %v141
      %v145 = vmul.f32 %v133, %v144
      %v146 = vsub.f32 1.0, %v143
      %v147 = vsub.f32 1.0, %v145
      %148 = vst.msk [vmem:[%s2] sm:$0xff] %vm98, %v146
      %149 = vst.msk [vmem:[%s2 + $0x8] sm:$0xff] %vm98, %v147
    $region25: #{tpu_custom_call.1} parent=1 // pred_fallthru
      _
    // Predicated region
    $region26: #{tpu_custom_call.1} parent=1 // pred_check
      _
    $region27: #{tpu_custom_call.1} parent=1 // pred_check_branch
      %151 = sbr.rel (0) target = $region29
    $region28: #{tpu_custom_call.1} parent=1 // pred_region
      _
    $region29: #{tpu_custom_call.1} parent=1 // pred_fallthru
      _
    // Predicated region
    $region30: #{tpu_custom_call.1} parent=1 // pred_check
      _
    $region31: #{tpu_custom_call.1} parent=1 // pred_check_branch
      %153 = sbr.rel (0) target = $region33
    $region32: #{tpu_custom_call.1} parent=1 // pred_region
      _
    $region33: #{tpu_custom_call.1} parent=1 // pred_fallthru
      _
    %154 = vsyncpa [#allocation6], 1
    %155 = vsyncpa [#allocation8], 1

</llo_original>
